<compile_context>
chip_gen: v5e
topology: v5e:2x2
jax: 0.10.0
libtpu: 0.0.40
codegen_flags: <defaults>
</compile_context>

<pallas_src>
import jax
import jax.numpy as jnp
from jax import lax
from jax.experimental import pallas as pl
from jax.experimental.pallas import tpu as pltpu

_INV_SQRT2 = 0.7071067811865476  # 1/sqrt(2): exact erf-based GELU (torch.nn.GELU default)

# Contract dim 1 of both operands: (A, F) x (rows, F) -> (A, rows)   ("NT" matmul)
_NT_DIMS = (((1,), (1,)), ((), ()))


def _pooler_kernel(x_ref, w_ref, b_ref, o_ref):
    # x_ref: (tm, F) tile of flattened (l, b, t)-rows
    # w_ref: (A, F)  torch Linear.weight (resident across the whole grid)
    # b_ref: (A, 1)  bias (resident)
    # o_ref: (A, tm) lane-dense output tile
    acc = lax.dot_general(
        w_ref[...], x_ref[...], _NT_DIMS,
        preferred_element_type=jnp.float32,
        precision=lax.Precision.HIGHEST,   # only affects f32 inputs; bf16 is 1-pass anyway
    )                                      # (A, tm), f32
    acc = acc + b_ref[...].astype(jnp.float32)
    gelu = 0.5 * acc * (1.0 + lax.erf(acc * _INV_SQRT2))  # exact GELU (EUP/VALU = free filler)
    o_ref[...] = gelu.astype(o_ref.dtype)


def _choose_row_tile(M, F, A, x_itemsize, out_itemsize, tm_target, vmem_budget_bytes):
    """Largest row tile (multiple of 128) fitting the VMEM budget, keeping >=8 grid steps."""
    # Double-buffered X tile + double-buffered (A, tm) output + f32 (A, tm) intermediate.
    bytes_per_row = 2 * F * x_itemsize + 2 * A * out_itemsize + A * 4
    tm = min(tm_target, max(128, vmem_budget_bytes // bytes_per_row))
    tm = max(128, (tm // 128) * 128)
    # Keep >= 8 grid steps so a 2-TensorCore part (v7x) can shard the parallel axis.
    min_steps = 8
    if M > min_steps * 128:
        tm = min(tm, ((pl.cdiv(M, min_steps) + 127) // 128) * 128)
    if M <= tm:
        tm = M  # tiny problem: single full-extent block
    return tm


def adapter_pooler_forward(x, weight, bias, *,
                           tm_target=8192,
                           vmem_budget_bytes=12 * 1024 * 1024):
    """x: [L, B, T, F]; weight: [A, F] (torch Linear.weight); bias: [A] -> [B, T, A, L]."""
    L, B, T, F = x.shape
    A = weight.shape[0]
    M = L * B * T

    X = x.reshape(M, F)          # metadata-only reshape; row order is (l, b, t)
    b2d = bias.reshape(A, 1)

    out_dtype = x.dtype
    x_itemsize = jnp.dtype(x.dtype).itemsize
    out_itemsize = jnp.dtype(out_dtype).itemsize
    w_itemsize = jnp.dtype(weight.dtype).itemsize

    tm = _choose_row_tile(M, F, A, x_itemsize, out_itemsize, tm_target, vmem_budget_bytes)
    grid = (pl.cdiv(M, tm),)

    cost = pl.CostEstimate(
        flops=2 * M * F * A,
        transcendentals=M * A,
        bytes_accessed=M * F * x_itemsize + (A * F + A) * w_itemsize + M * A * out_itemsize,
    )

    y = pl.pallas_call(
        _pooler_kernel,
        out_shape=jax.ShapeDtypeStruct((A, M), out_dtype),
        grid=grid,
        in_specs=[
            pl.BlockSpec((tm, F), lambda i: (i, 0)),   # X rows, streamed from HBM
            pl.BlockSpec((A, F), lambda i: (0, 0)),    # weight, resident
            pl.BlockSpec((A, 1), lambda i: (0, 0)),    # bias, resident
        ],
        out_specs=pl.BlockSpec((A, tm), lambda i: (0, i)),  # lane-dense output tile
        compiler_params=pltpu.CompilerParams(dimension_semantics=("parallel",)),
        cost_estimate=cost,
    )(X, weight, b2d)

    # Small layout glue: [A, L*B*T] -> [B, T, A, L].
    # TODO(synk): if the consumer can accept the kernel-native (A, L*B*T) layout,
    # return `y` directly and drop this XLA permute (saves ~A/F extra HBM traffic).
    return jnp.transpose(y.reshape(A, L, B, T), (2, 3, 0, 1))


def _reference(x, weight, bias):
    L, B, T, F = x.shape
    A = weight.shape[0]
    Xr = jnp.transpose(x, (1, 2, 0, 3)).reshape(-1, F)   # rows ordered (b, t, l) like torch
    y = jnp.matmul(Xr, weight.T, precision=lax.Precision.HIGHEST) + bias
    y = 0.5 * y * (1.0 + lax.erf(y * _INV_SQRT2))
    return jnp.transpose(y.reshape(B, T, L, A), (0, 1, 3, 2))


if __name__ == "__main__":
    # Small shapes consistent with the module: layers=4, batch=2, tokens=8,
    # features=128, adapter_dim=8
    L, B, T, F, A = 4, 2, 8, 128, 8

    key = jax.random.PRNGKey(0)
    kx, kw, kb = jax.random.split(key, 3)
    x = jax.random.normal(kx, (L, B, T, F), dtype=jnp.float32)
    # torch.nn.Linear(features, adapter_dim): weight [A, F], bias [A]
    weight = jax.random.normal(kw, (A, F), dtype=jnp.float32) * 0.05
    bias = jax.random.normal(kb, (A,), dtype=jnp.float32) * 0.01

    out = jax.block_until_ready(adapter_pooler_forward(x, weight, bias))

    ref = _reference(x, weight, bias)
    assert out.shape == (B, T, A, L), out.shape
    assert jnp.allclose(out, ref, atol=2e-5, rtol=2e-5), "mismatch vs reference"

    print("KERNEL_OK")
</pallas_src>

<mosaic_0001>
module attributes {stable_mosaic.version = 11 : i64} {
  func.func @_pooler_kernel(%arg0: i32, %arg1: memref<64x128xf32, #tpu.memory_space<vmem>>, %arg2: memref<8x128xf32, #tpu.memory_space<vmem>>, %arg3: memref<8x1xf32, #tpu.memory_space<vmem>>, %arg4: memref<8x64xf32, #tpu.memory_space<vmem>>) attributes {dimension_semantics = [#tpu.dimension_semantics<parallel>], iteration_bounds = array<i64: 1>, scalar_prefetch = 0 : i64, scratch_operands = 0 : i64, tpu.core_type = #tpu.core_type<tc>, window_params = [{transform_indices = @transform_0, window_bounds = array<i64: 64, 128>}, {pipeline_mode = #tpu.pipeline_mode<synchronous>, transform_indices = @transform_1, window_bounds = array<i64: 8, 128>}, {pipeline_mode = #tpu.pipeline_mode<synchronous>, transform_indices = @transform_2, window_bounds = array<i64: 8, 1>}, {transform_indices = @transform_3, window_bounds = array<i64: 8, 64>}]} {
    %c0 = arith.constant 0 : index
    %c0_0 = arith.constant 0 : index
    %0 = vector.load %arg2[%c0, %c0_0] : memref<8x128xf32, #tpu.memory_space<vmem>>, vector<8x128xf32>
    %c0_1 = arith.constant 0 : index
    %c0_2 = arith.constant 0 : index
    %1 = vector.load %arg1[%c0_1, %c0_2] : memref<64x128xf32, #tpu.memory_space<vmem>>, vector<64x128xf32>
    %cst = arith.constant dense<0.000000e+00> : vector<8x64xf32>
    %2 = tpu.matmul %0, %1, %cst {dimension_numbers = #tpu.dot_dimension_numbers<[1], [1], [0], [0], [0, 0, 1, 0], [], []>, precision = #tpu.contract_precision<fp32>} : vector<8x128xf32>, vector<64x128xf32>, vector<8x64xf32> -> vector<8x64xf32>
    %c0_3 = arith.constant 0 : index
    %c0_4 = arith.constant 0 : index
    %3 = vector.load %arg3[%c0_3, %c0_4] : memref<8x1xf32, #tpu.memory_space<vmem>>, vector<8x1xf32>
    %4 = vector.broadcast %3 : vector<8x1xf32> to vector<8x64xf32>
    %5 = arith.addf %2, %4 : vector<8x64xf32>
    %cst_5 = arith.constant 5.000000e-01 : f32
    %6 = vector.broadcast %cst_5 : f32 to vector<8x64xf32>
    %7 = arith.mulf %6, %5 : vector<8x64xf32>
    %cst_6 = arith.constant 0.707106769 : f32
    %8 = vector.broadcast %cst_6 : f32 to vector<8x64xf32>
    %9 = arith.mulf %5, %8 : vector<8x64xf32>
    %10 = math.erf %9 : vector<8x64xf32>
    %cst_7 = arith.constant 1.000000e+00 : f32
    %11 = vector.broadcast %cst_7 : f32 to vector<8x64xf32>
    %12 = arith.addf %11, %10 : vector<8x64xf32>
    %13 = arith.mulf %7, %12 : vector<8x64xf32>
    %c0_8 = arith.constant 0 : index
    %c0_9 = arith.constant 0 : index
    %14 = vector.load %arg4[%c0_8, %c0_9] : memref<8x64xf32, #tpu.memory_space<vmem>>, vector<8x64xf32>
    tpu.vector_store %arg4[%c0_8, %c0_9], %13 {strides = array<i32>} : memref<8x64xf32, #tpu.memory_space<vmem>>, vector<8x64xf32>,
    return
  }
  func.func @transform_0(%arg0: i32) -> (i32, i32) {
    %c0_i32 = arith.constant 0 : i32
    %c0_i32_0 = arith.constant 0 : i32
    return %arg0, %c0_i32 : i32, i32
  }
  func.func @transform_1(%arg0: i32) -> (i32, i32) {
    %c0_i32 = arith.constant 0 : i32
    %c0_i32_0 = arith.constant 0 : i32
    %c0_i32_1 = arith.constant 0 : i32
    return %c0_i32, %c0_i32_0 : i32, i32
  }
  func.func @transform_2(%arg0: i32) -> (i32, i32) {
    %c0_i32 = arith.constant 0 : i32
    %c0_i32_0 = arith.constant 0 : i32
    %c0_i32_1 = arith.constant 0 : i32
    return %c0_i32, %c0_i32_0 : i32, i32
  }
  func.func @transform_3(%arg0: i32) -> (i32, i32) {
    %c0_i32 = arith.constant 0 : i32
    %c0_i32_0 = arith.constant 0 : i32
    return %c0_i32, %arg0 : i32, i32
  }
}

</mosaic_0001>

<llo_original>
// kernel: tpu_custom_call.1
$region0: #{tpu_custom_call.1}
  #allocation0 [shape = 'u32[]', space=smem, size = 0x4, offset = 0x4, fixed_abs, tag = 'smem constant byte address 0x4 - core index']
  #allocation1 [shape = 'u32[72,128]{1,0:T(1,128)}', space=vmem, size = 0x9000, scoped, tag = 'internal scratch']
  %s0 = inlined_call_operand.hbm [shape: f32[64,128], index: 0, kind: input, shape index: {}]
  %s1 = inlined_call_operand.vmem [shape: f32[8,128], index: 1, kind: input, shape index: {}]
  %s2 = inlined_call_operand.vmem [shape: f32[8,1], index: 2, kind: input, shape index: {}]
  %s3 = inlined_call_operand.hbm [shape: f32[8,64], index: 3, kind: output, shape index: {}]
  %s4 = sld [smem:[#allocation0]]
  $region26: #{tpu_custom_call.1} parent=0
    _
  %s6 = ssub.s32 1, %s4
  %s7 = scalar_select 0, %s6, %s4
  $region1: #{tpu_custom_call.1} parent=0
    #allocation2 [shape = 'u8[32768]{0}', space=vmem, size = 0x8000, scoped, tag = 'input window, operand 0, single buffered']
    #allocation3 [shape = 's32[1]{0}', space=sflag, size = 0x4, scoped, tag = 'scoped memory for tpu_custom_call.1']
    #allocation4 [shape = 's32[1]{0}', space=sflag, size = 0x4, scoped, tag = 'scoped memory for tpu_custom_call.1']
    #allocation5 [shape = 'u8[4096]{0}', space=vmem, size = 0x1000, scoped, tag = 'output window, operand 0, single buffered']
    %8 = vsyncpa [#allocation3], 0
    %9 = vsyncpa [#allocation4], 0
    // Predicated region
    $region2: #{tpu_custom_call.1} parent=1 // pred_check
      _
    $region3: #{tpu_custom_call.1} parent=1 // pred_check_branch
      %11 = sbr.rel (0) target = $region5
    $region4: #{tpu_custom_call.1} parent=1 // pred_region
      %13 = vsyncadd [#allocation3], 0
      %s14 = sshll.u32 %s0, 4
      %s15 = int_to_ptr.hbm [resolvable:$true] %s14
      %s16 = sshll.u32 [#allocation2], 4
      %s17 = int_to_ptr.vmem [resolvable:$true] %s16
      %22 = dma.hbm_to_vmem [thread:$0]  %s15, 1024, %s17, [#allocation3], 128, 128, 8
    $region5: #{tpu_custom_call.1} parent=1 // pred_fallthru
      _
    // Predicated region
    $region6: #{tpu_custom_call.1} parent=1 // pred_check
      _
    $region7: #{tpu_custom_call.1} parent=1 // pred_check_branch
      %24 = sbr.rel (0) target = $region9
    $region8: #{tpu_custom_call.1} parent=1 // pred_region
      _
    $region9: #{tpu_custom_call.1} parent=1 // pred_fallthru
      _
    // Predicated region
    $region10: #{tpu_custom_call.1} parent=1 // pred_check
      _
    $region11: #{tpu_custom_call.1} parent=1 // pred_check_branch
      %26 = sbr.rel (0) target = $region13
    $region12: #{tpu_custom_call.1} parent=1 // pred_region
      _
    $region13: #{tpu_custom_call.1} parent=1 // pred_fallthru
      _
    // Predicated region
    $region14: #{tpu_custom_call.1} parent=1 // pred_check
      _
    $region15: #{tpu_custom_call.1} parent=1 // pred_check_branch
      %28 = sbr.rel (0) target = $region17
    $region16: #{tpu_custom_call.1} parent=1 // pred_region
      %30 = dma.done [#allocation3], 1024
    $region17: #{tpu_custom_call.1} parent=1 // pred_fallthru
      _
    %v31 = vld [vmem:[%s1] sm:$0xff]
    %v32 = vld [vmem:[#allocation2] sm:$0xff]
    %v33 = vld [vmem:[#allocation2 + $0x8] sm:$0xff]
    %v34 = vld [vmem:[#allocation2 + $0x10] sm:$0xff]
    %v35 = vld [vmem:[#allocation2 + $0x18] sm:$0xff]
    %v36 = vld [vmem:[#allocation2 + $0x20] sm:$0xff]
    %v37 = vld [vmem:[#allocation2 + $0x28] sm:$0xff]
    %v38 = vld [vmem:[#allocation2 + $0x30] sm:$0xff]
    %v39 = vld [vmem:[#allocation2 + $0x38] sm:$0xff]
    %v40 = vld [vmem:[%s2] sm:$0xff]
    %42 = vset.pattern.permute.xlu0 0
    %43 = vperm.xlu0 %42, %v40
    %v44 = vpop.permute.xlu0 %43
    %46 = vmatpush.xpose.msra.mxu0 0.0
    %47 = vmatpush.xpose.msra.mxu0 0.0
    %48 = vmatpush.xpose.msra.mxu0 0.0
    %49 = vmatpush.xpose.msra.mxu0 0.0
    %50 = vmatpush.xpose.msra.mxu0 0.0
    %51 = vmatpush.xpose.msra.mxu0 0.0
    %52 = vmatpush.xpose.msra.mxu0 0.0
    %53 = vmatpush.xpose.msra.mxu0 0.0
    %v54 = vand.u32 %v39, 4294901760
    %55 = vmatpush.xpose.msra.mxu0 %v54
    %v56 = vand.u32 %v38, 4294901760
    %57 = vmatpush.xpose.msra.mxu0 %v56
    %v58 = vand.u32 %v37, 4294901760
    %59 = vmatpush.xpose.msra.mxu0 %v58
    %v60 = vand.u32 %v36, 4294901760
    %61 = vmatpush.xpose.msra.mxu0 %v60
    %v62 = vand.u32 %v35, 4294901760
    %63 = vmatpush.xpose.msra.mxu0 %v62
    %v64 = vand.u32 %v34, 4294901760
    %65 = vmatpush.xpose.msra.mxu0 %v64
    %v66 = vand.u32 %v33, 4294901760
    %67 = vmatpush.xpose.msra.mxu0 %v66
    %v68 = vand.u32 %v32, 4294901760
    %69 = vmatpush.xpose.msra.mxu0 %v68
    %v70 = vand.u32 %v31, 4294901760
    %v71 = vsub.f32 %v31, %v70
    %v72 = vand.u32 %v71, 4294901760
    %v73 = vsub.f32 %v71, %v72
    %v74 = vand.u32 %v73, 4294901760
    %75 = vmatmul.f32.gmra.mxu0 %v74
    %v76 = vpop.f32.mrf.mxu0
    %v77 = vadd.f32 %v44, %v76
    %78 = vdwg.mxu0
    %79 = vmatpush.xpose.msra.mxu0 0.0
    %80 = vmatpush.xpose.msra.mxu0 0.0
    %81 = vmatpush.xpose.msra.mxu0 0.0
    %82 = vmatpush.xpose.msra.mxu0 0.0
    %83 = vmatpush.xpose.msra.mxu0 0.0
    %84 = vmatpush.xpose.msra.mxu0 0.0
    %85 = vmatpush.xpose.msra.mxu0 0.0
    %86 = vmatpush.xpose.msra.mxu0 0.0
    %v87 = vand.u32 %v39, 4294901760
    %v88 = vsub.f32 %v39, %v87
    %v89 = vand.u32 %v88, 4294901760
    %v90 = vsub.f32 %v88, %v89
    %v91 = vand.u32 %v90, 4294901760
    %92 = vmatpush.xpose.msra.mxu0 %v91
    %v93 = vand.u32 %v38, 4294901760
    %v94 = vsub.f32 %v38, %v93
    %v95 = vand.u32 %v94, 4294901760
    %v96 = vsub.f32 %v94, %v95
    %v97 = vand.u32 %v96, 4294901760
    %98 = vmatpush.xpose.msra.mxu0 %v97
    %v99 = vand.u32 %v37, 4294901760
    %v100 = vsub.f32 %v37, %v99
    %v101 = vand.u32 %v100, 4294901760
    %v102 = vsub.f32 %v100, %v101
    %v103 = vand.u32 %v102, 4294901760
    %104 = vmatpush.xpose.msra.mxu0 %v103
    %v105 = vand.u32 %v36, 4294901760
    %v106 = vsub.f32 %v36, %v105
    %v107 = vand.u32 %v106, 4294901760
    %v108 = vsub.f32 %v106, %v107
    %v109 = vand.u32 %v108, 4294901760
    %110 = vmatpush.xpose.msra.mxu0 %v109
    %v111 = vand.u32 %v35, 4294901760
    %v112 = vsub.f32 %v35, %v111
    %v113 = vand.u32 %v112, 4294901760
    %v114 = vsub.f32 %v112, %v113
    %v115 = vand.u32 %v114, 4294901760
    %116 = vmatpush.xpose.msra.mxu0 %v115
    %v117 = vand.u32 %v34, 4294901760
    %v118 = vsub.f32 %v34, %v117
    %v119 = vand.u32 %v118, 4294901760
    %v120 = vsub.f32 %v118, %v119
    %v121 = vand.u32 %v120, 4294901760
    %122 = vmatpush.xpose.msra.mxu0 %v121
    %v123 = vand.u32 %v33, 4294901760
    %v124 = vsub.f32 %v33, %v123
    %v125 = vand.u32 %v124, 4294901760
    %v126 = vsub.f32 %v124, %v125
    %v127 = vand.u32 %v126, 4294901760
    %128 = vmatpush.xpose.msra.mxu0 %v127
    %v129 = vand.u32 %v32, 4294901760
    %v130 = vsub.f32 %v32, %v129
    %v131 = vand.u32 %v130, 4294901760
    %v132 = vsub.f32 %v130, %v131
    %v133 = vand.u32 %v132, 4294901760
    %134 = vmatpush.xpose.msra.mxu0 %v133
    %v135 = vand.u32 %v31, 4294901760
    %136 = vmatmul.f32.gmra.mxu0 %v135
    %v137 = vpop.f32.mrf.mxu0
    %v138 = vadd.f32 %v77, %v137
    %139 = vdwg.mxu0
    %140 = vmatpush.xpose.msra.mxu0 0.0
    %141 = vmatpush.xpose.msra.mxu0 0.0
    %142 = vmatpush.xpose.msra.mxu0 0.0
    %143 = vmatpush.xpose.msra.mxu0 0.0
    %144 = vmatpush.xpose.msra.mxu0 0.0
    %145 = vmatpush.xpose.msra.mxu0 0.0
    %146 = vmatpush.xpose.msra.mxu0 0.0
    %147 = vmatpush.xpose.msra.mxu0 0.0
    %v148 = vand.u32 %v39, 4294901760
    %v149 = vsub.f32 %v39, %v148
    %150 = vmatpush.xpose.msra.mxu0 %v149
    %v151 = vand.u32 %v38, 4294901760
    %v152 = vsub.f32 %v38, %v151
    %153 = vmatpush.xpose.msra.mxu0 %v152
    %v154 = vand.u32 %v37, 4294901760
    %v155 = vsub.f32 %v37, %v154
    %156 = vmatpush.xpose.msra.mxu0 %v155
    %v157 = vand.u32 %v36, 4294901760
    %v158 = vsub.f32 %v36, %v157
    %159 = vmatpush.xpose.msra.mxu0 %v158
    %v160 = vand.u32 %v35, 4294901760
    %v161 = vsub.f32 %v35, %v160
    %162 = vmatpush.xpose.msra.mxu0 %v161
    %v163 = vand.u32 %v34, 4294901760
    %v164 = vsub.f32 %v34, %v163
    %165 = vmatpush.xpose.msra.mxu0 %v164
    %v166 = vand.u32 %v33, 4294901760
    %v167 = vsub.f32 %v33, %v166
    %168 = vmatpush.xpose.msra.mxu0 %v167
    %v169 = vand.u32 %v32, 4294901760
    %v170 = vsub.f32 %v32, %v169
    %171 = vmatpush.xpose.msra.mxu0 %v170
    %v172 = vand.u32 %v31, 4294901760
    %v173 = vsub.f32 %v31, %v172
    %174 = vmatmul.f32.gmra.mxu0 %v173
    %v175 = vpop.f32.mrf.mxu0
    %v176 = vadd.f32 %v138, %v175
    %177 = vdwg.mxu0
    %178 = vmatpush.xpose.msra.mxu0 0.0
    %179 = vmatpush.xpose.msra.mxu0 0.0
    %180 = vmatpush.xpose.msra.mxu0 0.0
    %181 = vmatpush.xpose.msra.mxu0 0.0
    %182 = vmatpush.xpose.msra.mxu0 0.0
    %183 = vmatpush.xpose.msra.mxu0 0.0
    %184 = vmatpush.xpose.msra.mxu0 0.0
    %185 = vmatpush.xpose.msra.mxu0 0.0
    %v186 = vand.u32 %v39, 4294901760
    %187 = vmatpush.xpose.msra.mxu0 %v186
    %v188 = vand.u32 %v38, 4294901760
    %189 = vmatpush.xpose.msra.mxu0 %v188
    %v190 = vand.u32 %v37, 4294901760
    %191 = vmatpush.xpose.msra.mxu0 %v190
    %v192 = vand.u32 %v36, 4294901760
    %193 = vmatpush.xpose.msra.mxu0 %v192
    %v194 = vand.u32 %v35, 4294901760
    %195 = vmatpush.xpose.msra.mxu0 %v194
    %v196 = vand.u32 %v34, 4294901760
    %197 = vmatpush.xpose.msra.mxu0 %v196
    %v198 = vand.u32 %v33, 4294901760
    %199 = vmatpush.xpose.msra.mxu0 %v198
    %v200 = vand.u32 %v32, 4294901760
    %201 = vmatpush.xpose.msra.mxu0 %v200
    %v202 = vand.u32 %v31, 4294901760
    %v203 = vsub.f32 %v31, %v202
    %v204 = vand.u32 %v203, 4294901760
    %205 = vmatmul.f32.gmra.mxu0 %v204
    %v206 = vpop.f32.mrf.mxu0
    %v207 = vadd.f32 %v176, %v206
    %208 = vdwg.mxu0
    %209 = vmatpush.xpose.msra.mxu0 0.0
    %210 = vmatpush.xpose.msra.mxu0 0.0
    %211 = vmatpush.xpose.msra.mxu0 0.0
    %212 = vmatpush.xpose.msra.mxu0 0.0
    %213 = vmatpush.xpose.msra.mxu0 0.0
    %214 = vmatpush.xpose.msra.mxu0 0.0
    %215 = vmatpush.xpose.msra.mxu0 0.0
    %216 = vmatpush.xpose.msra.mxu0 0.0
    %v217 = vand.u32 %v39, 4294901760
    %v218 = vsub.f32 %v39, %v217
    %v219 = vand.u32 %v218, 4294901760
    %220 = vmatpush.xpose.msra.mxu0 %v219
    %v221 = vand.u32 %v38, 4294901760
    %v222 = vsub.f32 %v38, %v221
    %v223 = vand.u32 %v222, 4294901760
    %224 = vmatpush.xpose.msra.mxu0 %v223
    %v225 = vand.u32 %v37, 4294901760
    %v226 = vsub.f32 %v37, %v225
    %v227 = vand.u32 %v226, 4294901760
    %228 = vmatpush.xpose.msra.mxu0 %v227
    %v229 = vand.u32 %v36, 4294901760
    %v230 = vsub.f32 %v36, %v229
    %v231 = vand.u32 %v230, 4294901760
    %232 = vmatpush.xpose.msra.mxu0 %v231
    %v233 = vand.u32 %v35, 4294901760
    %v234 = vsub.f32 %v35, %v233
    %v235 = vand.u32 %v234, 4294901760
    %236 = vmatpush.xpose.msra.mxu0 %v235
    %v237 = vand.u32 %v34, 4294901760
    %v238 = vsub.f32 %v34, %v237
    %v239 = vand.u32 %v238, 4294901760
    %240 = vmatpush.xpose.msra.mxu0 %v239
    %v241 = vand.u32 %v33, 4294901760
    %v242 = vsub.f32 %v33, %v241
    %v243 = vand.u32 %v242, 4294901760
    %244 = vmatpush.xpose.msra.mxu0 %v243
    %v245 = vand.u32 %v32, 4294901760
    %v246 = vsub.f32 %v32, %v245
    %v247 = vand.u32 %v246, 4294901760
    %248 = vmatpush.xpose.msra.mxu0 %v247
    %v249 = vand.u32 %v31, 4294901760
    %250 = vmatmul.f32.gmra.mxu0 %v249
    %v251 = vpop.f32.mrf.mxu0
    %v252 = vadd.f32 %v207, %v251
    %253 = vdwg.mxu0
    %254 = vmatpush.xpose.msra.mxu0 0.0
    %255 = vmatpush.xpose.msra.mxu0 0.0
    %256 = vmatpush.xpose.msra.mxu0 0.0
    %257 = vmatpush.xpose.msra.mxu0 0.0
    %258 = vmatpush.xpose.msra.mxu0 0.0
    %259 = vmatpush.xpose.msra.mxu0 0.0
    %260 = vmatpush.xpose.msra.mxu0 0.0
    %261 = vmatpush.xpose.msra.mxu0 0.0
    %v262 = vand.u32 %v39, 4294901760
    %263 = vmatpush.xpose.msra.mxu0 %v262
    %v264 = vand.u32 %v38, 4294901760
    %265 = vmatpush.xpose.msra.mxu0 %v264
    %v266 = vand.u32 %v37, 4294901760
    %267 = vmatpush.xpose.msra.mxu0 %v266
    %v268 = vand.u32 %v36, 4294901760
    %269 = vmatpush.xpose.msra.mxu0 %v268
    %v270 = vand.u32 %v35, 4294901760
    %271 = vmatpush.xpose.msra.mxu0 %v270
    %v272 = vand.u32 %v34, 4294901760
    %273 = vmatpush.xpose.msra.mxu0 %v272
    %v274 = vand.u32 %v33, 4294901760
    %275 = vmatpush.xpose.msra.mxu0 %v274
    %v276 = vand.u32 %v32, 4294901760
    %277 = vmatpush.xpose.msra.mxu0 %v276
    %v278 = vand.u32 %v31, 4294901760
    %279 = vmatmul.f32.gmra.mxu0 %v278
    %v280 = vpop.f32.mrf.mxu0
    %v281 = vadd.f32 %v252, %v280
    %282 = vdwg.mxu0
    %v283 = vmul.f32 %v281, 0.5
    %v284 = vmul.f32 %v281, 0.70710677
    %v285 = vmul.f32 %v284, %v284
    %v286 = vmin.f32 16.0, %v285
    %v287 = vmul.f32 %v286, 2.1237322e-06
    %v288 = vadd.f32 %v287, 0.00028619796
    %v289 = vmul.f32 %v286, %v288
    %v290 = vadd.f32 %v289, 0.0036580483
    %v291 = vmul.f32 %v286, %v290
    %v292 = vadd.f32 %v291, 0.05243302
    %v293 = vmul.f32 %v286, %v292
    %v294 = vadd.f32 %v293, 0.18741608
    %v295 = vmul.f32 %v286, %v294
    %v296 = vadd.f32 %v295, 1.1283791
    %v297 = vmul.f32 %v284, %v296
    %v298 = vmul.f32 %v286, 3.8918573e-05
    %v299 = vadd.f32 %v298, 0.001143296
    %v300 = vmul.f32 %v286, %v299
    %v301 = vadd.f32 %v300, 0.014752088
    %v302 = vmul.f32 %v286, %v301
    %v303 = vadd.f32 %v302, 0.112945676
    %v304 = vmul.f32 %v286, %v303
    %v305 = vadd.f32 %v304, 0.4994258
    %v306 = vmul.f32 %v286, %v305
    %v307 = vadd.f32 %v306, 1.0
    %v308 = vrcp.pop %v307
    %v309 = vmul.f32 %v307, %v308
    %v310 = vsub.f32 1.0, %v309
    %v311 = vmul.f32 %v308, %v310
    %v312 = vadd.f32 %v308, %v311
    %vm313 = vweird.f32 %v307
    %vm314 = vweird.f32 %v308
    %vm315 = vmor %vm313, %vm314
    %v316 = vsel %vm315, %v308, %v312
    %v317 = vand.u32 2147483647, %v307
    %vm318 = vcmp.eq.f32.partialorder %v317, 8.507059e+37
    %v319 = vand.u32 %v307, 2147483648
    %v320 = vor.u32 1.1754944e-38, %v319
    %v321 = vsel %vm318, %v320, %v316
    %v322 = vmul.f32 %v297, %v321
    %v323 = vmin.f32 %v322, 1.0
    %v324 = vmax.f32 %v323, -1.0
    %v325 = vadd.f32 %v324, 1.0
    %v326 = vmul.f32 %v283, %v325
    %vm327 = vcmask 523264
    %328 = vst.msk [vmem:[#allocation5] sm:$0xff] %vm327, %v326
    // Predicated region
    $region18: #{tpu_custom_call.1} parent=1 // pred_check
      _
    $region19: #{tpu_custom_call.1} parent=1 // pred_check_branch
      %330 = sbr.rel (0) target = $region21
    $region20: #{tpu_custom_call.1} parent=1 // pred_region
      %332 = vsyncadd [#allocation4], 0
      %s334 = sshll.u32 [#allocation5], 4
      %s335 = int_to_ptr.vmem [resolvable:$true] %s334
      %s336 = sshll.u32 %s3, 4
      %s337 = int_to_ptr.hbm [resolvable:$true] %s336
      %339 = dma.vmem_to_hbm [thread:$0]  %s335, 128, %s337, [#allocation4]
    $region21: #{tpu_custom_call.1} parent=1 // pred_fallthru
      _
    // Predicated region
    $region22: #{tpu_custom_call.1} parent=1 // pred_check
      _
    $region23: #{tpu_custom_call.1} parent=1 // pred_check_branch
      %341 = sbr.rel (0) target = $region25
    $region24: #{tpu_custom_call.1} parent=1 // pred_region
      %343 = dma.done [#allocation4], 128
    $region25: #{tpu_custom_call.1} parent=1 // pred_fallthru
      _
    %344 = vsyncpa [#allocation3], 1
    %345 = vsyncpa [#allocation4], 1

</llo_original>
